<compile_context>
chip_gen: v7x
topology: tpu7x:2x2x1
jax: 0.10.0
libtpu: 0.0.40
codegen_flags: <defaults>
</compile_context>

<pallas_src>
import jax
import jax.numpy as jnp
from jax.experimental import pallas as pl
from jax.experimental.pallas import tpu as pltpu

INPUT_DIM = 3
OUTPUT_DIM = 1

_MAX_TILE_B = 128 * 1024   # 128K lanes -> ~16 MiB double-buffered f32 VMEM footprint
_MIN_TILE_B = 512          # at/below this, run a single full-array block
_TARGET_STEPS = 8          # keep >=4-8 grid steps (pipelining + v7x's 2 TensorCores)


def _round_up(x, m):
    return ((x + m - 1) // m) * m


def _linear_kernel(w_ref, b_ref, xt_ref, o_ref):
    """o[j, :] = sum_k w[j*in_f + k] * xt[k, :] + b[j]   (pure VPU, lane-dense output)."""
    in_f = xt_ref.shape[0]
    out_f = o_ref.shape[0]
    for j in range(out_f):            # static unroll (out_f == 1)
        acc = xt_ref[0:1, :] * w_ref[j * in_f + 0]
        for k in range(1, in_f):      # static unroll (in_f == 3)
            acc = acc + xt_ref[k:k + 1, :] * w_ref[j * in_f + k]
        o_ref[j:j + 1, :] = acc + b_ref[j]


@jax.jit
def multi_linear_regression(x, weight, bias):
    """Forward pass of nn.Linear: x @ weight.T + bias.

    x:      (batch, in_features)        float32
    weight: (out_features, in_features) float32  (PyTorch convention)
    bias:   (out_features,)             float32
    returns (batch, out_features)       float32
    """
    batch, in_f = x.shape
    out_f = weight.shape[0]

    # Batch lane-dense, K (=3) in sublanes.  allow_input_fusion below lets XLA fuse
    # this transpose into the pallas_call operand instead of a separate HBM pass.
    xt = jnp.transpose(x)                  # (in_f, batch)
    w_flat = jnp.reshape(weight, (-1,))    # (out_f * in_f,) -> tidy 1-D SMEM table

    if batch <= _MIN_TILE_B:
        tile_b = batch                     # single full-array block (always legal)
    else:
        tile_b = _round_up(pl.cdiv(batch, _TARGET_STEPS), 128)
        tile_b = max(_MIN_TILE_B, min(_MAX_TILE_B, tile_b))
    grid = (pl.cdiv(batch, tile_b),)       # ragged last block: Pallas masks edge DMAs

    out_t = pl.pallas_call(
        _linear_kernel,
        out_shape=jax.ShapeDtypeStruct((out_f, batch), jnp.float32),
        grid=grid,
        in_specs=[
            # weight & bias: tiny scalar tables in SMEM, no per-step tiling
            pl.BlockSpec(memory_space=pltpu.MemorySpace.SMEM),
            pl.BlockSpec(memory_space=pltpu.MemorySpace.SMEM),
            # xT: (in_f, tile_b) blocks, batch tiled along the lane dim
            pl.BlockSpec((in_f, tile_b), lambda i: (0, i)),
        ],
        out_specs=pl.BlockSpec((out_f, tile_b), lambda i: (0, i)),
        compiler_params=pltpu.CompilerParams(
            dimension_semantics=("parallel",),       # shards tiles across TCs on v7x
            vmem_limit_bytes=48 * 1024 * 1024,       # > v5e 16 MiB default, < v7x 64 MiB
            allow_input_fusion=[False, False, True],  # let XLA fuse the transpose in
        ),
    )(w_flat, bias, xt)

    return out_t.T   # (batch, out_f); free relayout for out_f == 1


def init_params(key, in_features, out_features):
    # Mimic PyTorch nn.Linear default init: U(-1/sqrt(in), 1/sqrt(in)).
    kw, kb = jax.random.split(key)
    bound = 1.0 / (in_features ** 0.5)
    weight = jax.random.uniform(
        kw, (out_features, in_features), jnp.float32, -bound, bound
    )
    bias = jax.random.uniform(kb, (out_features,), jnp.float32, -bound, bound)
    return weight, bias


if __name__ == "__main__":
    key = jax.random.PRNGKey(0)
    k_p, k_x1, k_x2 = jax.random.split(key, 3)

    weight, bias = init_params(k_p, INPUT_DIM, OUTPUT_DIM)

    # Small batch: single full-array block (no grid tiling).
    batch1 = 8
    x1 = jax.random.normal(k_x1, (batch1, INPUT_DIM), jnp.float32)
    out1 = jax.block_until_ready(multi_linear_regression(x1, weight, bias))
    ref1 = x1 @ weight.T + bias
    assert out1.shape == (batch1, OUTPUT_DIM), out1.shape
    assert jnp.allclose(out1, ref1, atol=1e-5)

    # Tiled path: grid > 1 with a ragged (partially out-of-bounds) last block.
    batch2 = 2304
    x2 = jax.random.normal(k_x2, (batch2, INPUT_DIM), jnp.float32)
    out2 = jax.block_until_ready(multi_linear_regression(x2, weight, bias))
    ref2 = x2 @ weight.T + bias
    assert out2.shape == (batch2, OUTPUT_DIM), out2.shape
    assert jnp.allclose(out2, ref2, atol=1e-5)

    print("KERNEL_OK")
</pallas_src>

<mosaic_0001>
module attributes {stable_mosaic.version = 11 : i64} {
  func.func @_linear_kernel(%arg0: i32, %arg1: memref<3xf32, #tpu.memory_space<smem>>, %arg2: memref<1xf32, #tpu.memory_space<smem>>, %arg3: memref<3x8xf32, #tpu.memory_space<vmem>>, %arg4: memref<1x8xf32, #tpu.memory_space<vmem>>) attributes {dimension_semantics = [#tpu.dimension_semantics<parallel>], iteration_bounds = array<i64: 1>, scalar_prefetch = 0 : i64, scratch_operands = 0 : i64, tpu.core_type = #tpu.core_type<tc>, window_params = [{transform_indices = @transform_0, window_bounds = array<i64: 3>}, {transform_indices = @transform_1, window_bounds = array<i64: 1>}, {transform_indices = @transform_2, window_bounds = array<i64: 3, 8>}, {transform_indices = @transform_3, window_bounds = array<i64: 1, 8>}]} {
    %c0 = arith.constant 0 : index
    %c0_0 = arith.constant 0 : index
    %0 = vector.load %arg3[%c0, %c0_0] : memref<3x8xf32, #tpu.memory_space<vmem>>, vector<1x8xf32>
    %c0_1 = arith.constant 0 : index
    %1 = memref.load %arg1[%c0_1] : memref<3xf32, #tpu.memory_space<smem>>
    %2 = vector.broadcast %1 : f32 to vector<1x8xf32>
    %3 = arith.mulf %0, %2 : vector<1x8xf32>
    %c1 = arith.constant 1 : index
    %c0_2 = arith.constant 0 : index
    %4 = vector.load %arg3[%c1, %c0_2] : memref<3x8xf32, #tpu.memory_space<vmem>>, vector<1x8xf32>
    %c1_3 = arith.constant 1 : index
    %5 = memref.load %arg1[%c1_3] : memref<3xf32, #tpu.memory_space<smem>>
    %6 = vector.broadcast %5 : f32 to vector<1x8xf32>
    %7 = arith.mulf %4, %6 : vector<1x8xf32>
    %8 = arith.addf %3, %7 : vector<1x8xf32>
    %c2 = arith.constant 2 : index
    %c0_4 = arith.constant 0 : index
    %9 = vector.load %arg3[%c2, %c0_4] : memref<3x8xf32, #tpu.memory_space<vmem>>, vector<1x8xf32>
    %c2_5 = arith.constant 2 : index
    %10 = memref.load %arg1[%c2_5] : memref<3xf32, #tpu.memory_space<smem>>
    %11 = vector.broadcast %10 : f32 to vector<1x8xf32>
    %12 = arith.mulf %9, %11 : vector<1x8xf32>
    %13 = arith.addf %8, %12 : vector<1x8xf32>
    %c0_6 = arith.constant 0 : index
    %14 = memref.load %arg2[%c0_6] : memref<1xf32, #tpu.memory_space<smem>>
    %15 = vector.broadcast %14 : f32 to vector<1x8xf32>
    %16 = arith.addf %13, %15 : vector<1x8xf32>
    %c0_7 = arith.constant 0 : index
    %c0_8 = arith.constant 0 : index
    %17 = vector.load %arg4[%c0_7, %c0_8] : memref<1x8xf32, #tpu.memory_space<vmem>>, vector<1x8xf32>
    tpu.vector_store %arg4[%c0_7, %c0_8], %16 {strides = array<i32>} : memref<1x8xf32, #tpu.memory_space<vmem>>, vector<1x8xf32>,
    return
  }
  func.func @transform_0(%arg0: i32) -> i32 {
    %c0_i32 = arith.constant 0 : i32
    %c0_i32_0 = arith.constant 0 : i32
    return %c0_i32 : i32
  }
  func.func @transform_1(%arg0: i32) -> i32 {
    %c0_i32 = arith.constant 0 : i32
    %c0_i32_0 = arith.constant 0 : i32
    return %c0_i32 : i32
  }
  func.func @transform_2(%arg0: i32) -> (i32, i32) {
    %c0_i32 = arith.constant 0 : i32
    %c0_i32_0 = arith.constant 0 : i32
    return %c0_i32, %arg0 : i32, i32
  }
  func.func @transform_3(%arg0: i32) -> (i32, i32) {
    %c0_i32 = arith.constant 0 : i32
    %c0_i32_0 = arith.constant 0 : i32
    return %c0_i32, %arg0 : i32, i32
  }
}

</mosaic_0001>

<llo_original>
// kernel: multi_linear_regression.2
$region0: #{multi_linear_regression.2}
  #allocation0 [shape = 'u32[]', space=smem, size = 0x4, offset = 0x4, fixed_abs, tag = 'smem constant byte address 0x4 - core index']
  #allocation1 [shape = 'u32[144,128]{1,0:T(1,128)}', space=vmem, size = 0x12000, scoped, tag = 'internal scratch']
  #allocation2 [shape = 'f32[1]{0:T(128)S(6)}', space=smem, size = 0x200, scoped, tag = 'scoped memory for multi_linear_regression.2']
  %s0 = inlined_call_operand.vmem [shape: f32[3], index: 0, kind: input, shape index: {}]
  %s1 = inlined_call_operand.<no memory space> [shape: f32[1], index: 1, kind: input, shape index: {}]
  %s2 = inlined_call_operand.vmem [shape: f32[8,3], index: 2, kind: input, shape index: {}]
  %s3 = inlined_call_operand.hbm [shape: f32[1,8], index: 3, kind: output, shape index: {}]
  %s4 = sld [smem:[#allocation0]]
  $region26: #{multi_linear_regression.2} parent=0
    _
  %s6 = ssub.s32 1, %s4
  %s7 = scalar_select 0, %s6, %s4
  %8 = sst [smem:[#allocation2]] %s1
  $region1: #{multi_linear_regression.2} parent=0
    #allocation3 [shape = 'u8[512]{0}', space=smem, size = 0x200, scoped, tag = 'input window, operand 0, single buffered']
    #allocation4 [shape = 's32[1]{0}', space=sflag, size = 0x4, scoped, tag = 'scoped memory for multi_linear_regression.2']
    #allocation5 [shape = 's32[1]{0}', space=sflag, size = 0x4, scoped, tag = 'scoped memory for multi_linear_regression.2']
    #allocation6 [shape = 'u8[512]{0}', space=vmem, size = 0x400, scoped, tag = 'output window, operand 0, single buffered']
    #allocation7 [shape = 'u8[2048]{0}', space=vmem, size = 0x800, dematerialized = true, scoped, tag = 'FusionAdapter Buffer %fusion.1 = f32[3,8]{1,0:T(4,128)} fusion(%param_2.1), kind=kLoop, calls=%fused_computation.1.clone, metadata={op_name="jit(multi_linear_regression)/transpose" stack_frame_id=7}']
    %9 = vsyncpa [#allocation5], 0
    %10 = vsyncpa [#allocation4], 0
    // Predicated region
    $region2: #{multi_linear_regression.2} parent=1 // pred_check
      _
    $region3: #{multi_linear_regression.2} parent=1 // pred_check_branch
      %12 = sbr.rel (0) target = $region5
    $region4: #{multi_linear_regression.2} parent=1 // pred_region
      %s14 = ssub.s32 16, 16
      %15 = vsyncadd [#allocation5], %s14
      %s17 = sshll.u32 %s0, 4
      %s18 = int_to_ptr.vmem [resolvable:$true] %s17
      %20 = dma.vmem_to_smem %s18, 16, [#allocation3], [#allocation5]
    $region5: #{multi_linear_regression.2} parent=1 // pred_fallthru
      _
    // Predicated region
    $region6: #{multi_linear_regression.2} parent=1 // pred_check
      _
    $region7: #{multi_linear_regression.2} parent=1 // pred_check_branch
      %22 = sbr.rel (0) target = $region9
    $region8: #{multi_linear_regression.2} parent=1 // pred_region
      _
    $region9: #{multi_linear_regression.2} parent=1 // pred_fallthru
      _
    // Predicated region
    $region10: #{multi_linear_regression.2} parent=1 // pred_check
      _
    $region11: #{multi_linear_regression.2} parent=1 // pred_check_branch
      %24 = sbr.rel (0) target = $region13
    $region12: #{multi_linear_regression.2} parent=1 // pred_region
      _
    $region13: #{multi_linear_regression.2} parent=1 // pred_fallthru
      _
    // Predicated region
    $region14: #{multi_linear_regression.2} parent=1 // pred_check
      _
    $region15: #{multi_linear_regression.2} parent=1 // pred_check_branch
      %26 = sbr.rel (0) target = $region17
    $region16: #{multi_linear_regression.2} parent=1 // pred_region
      %27 = dma.done [#allocation5], 16
    $region17: #{multi_linear_regression.2} parent=1 // pred_fallthru
      _
    %28 = sfence
    %v29 = vld [vmem:[%s2] sm:$0x7]
    %31 = vst [vmem:[#allocation7] sm:$0xf] %v29
    %v32 = vld [vmem:[#allocation7] sm:$0x1]
    %s33 = sld [smem:[#allocation3]]
    %v34 = vstv %s33
    %v35 = vmul.f32 %v32, %v34
    %v36 = vld [vmem:[#allocation7 + $0x1] sm:$0x1]
    %s37 = sld [smem:[#allocation3 + $0x1]]
    %v38 = vstv %s37
    %v39 = vmul.f32 %v36, %v38
    %v40 = vadd.f32 %v35, %v39
    %v41 = vld [vmem:[#allocation7 + $0x2] sm:$0x1]
    %s42 = sld [smem:[#allocation3 + $0x2]]
    %v43 = vstv %s42
    %v44 = vmul.f32 %v41, %v43
    %v45 = vadd.f32 %v40, %v44
    %s46 = sld [smem:[#allocation2]]
    %v47 = vstv %s46
    %v48 = vadd.f32 %v45, %v47
    %vm49 = vcmask 57344
    %50 = vst.msk [vmem:[#allocation6] sm:$0x1] %vm49, %v48
    // Predicated region
    $region18: #{multi_linear_regression.2} parent=1 // pred_check
      _
    $region19: #{multi_linear_regression.2} parent=1 // pred_check_branch
      %52 = sbr.rel (0) target = $region21
    $region20: #{multi_linear_regression.2} parent=1 // pred_region
      %s54 = ssub.s32 16, 16
      %55 = vsyncadd [#allocation4], %s54
      %s57 = sshll.u32 [#allocation6], 4
      %s58 = int_to_ptr.vmem [resolvable:$true] %s57
      %60 = dma.vmem_to_hbm [thread:$0]  %s58, 16, %s3, [#allocation4]
    $region21: #{multi_linear_regression.2} parent=1 // pred_fallthru
      _
    // Predicated region
    $region22: #{multi_linear_regression.2} parent=1 // pred_check
      _
    $region23: #{multi_linear_regression.2} parent=1 // pred_check_branch
      %62 = sbr.rel (0) target = $region25
    $region24: #{multi_linear_regression.2} parent=1 // pred_region
      %63 = dma.done [#allocation4], 16
    $region25: #{multi_linear_regression.2} parent=1 // pred_fallthru
      _
    %64 = vsyncpa [#allocation4], 1
    %65 = vsyncpa [#allocation5], 1

</llo_original>
